<compile_context>
chip_gen: v6e
topology: v6e:2x2x1
jax: 0.10.0
libtpu: 0.0.40
codegen_flags: <defaults>
</compile_context>

<pallas_src>
import jax
import jax.numpy as jnp
from jax.experimental import pallas as pl
from jax.experimental.pallas import tpu as pltpu


def _round_up(x, m):
    return (x + m - 1) // m * m


def _pad2d(x, mp, np_):
    m, n = x.shape
    if m == mp and n == np_:
        return x
    return jnp.pad(x, ((0, mp - m), (0, np_ - n)))


# ---------------------------------------------------------------------------
# Pallas kernel 1: tiled matmul with fused BN scale/bias, optional residual
# add, optional ReLU.  Grid = (M tiles, N tiles, K tiles); K last (reduction).
# ---------------------------------------------------------------------------
def _make_matmul_kernel(apply_relu, has_residual):
    def kernel(a_ref, b_ref, scale_ref, bias_ref, *rest):
        if has_residual:
            res_ref, o_ref, acc_ref = rest
        else:
            o_ref, acc_ref = rest

        @pl.when(pl.program_id(2) == 0)
        def _():
            acc_ref[...] = jnp.zeros_like(acc_ref)

        acc_ref[...] += jnp.dot(a_ref[...], b_ref[...],
                                preferred_element_type=jnp.float32)

        @pl.when(pl.program_id(2) == pl.num_programs(2) - 1)
        def _():
            y = acc_ref[...] * scale_ref[...] + bias_ref[...]
            if has_residual:
                y = y + res_ref[...].astype(jnp.float32)
            if apply_relu:
                y = jnp.maximum(y, 0.0)
            o_ref[...] = y.astype(o_ref.dtype)

    return kernel


def _pick_tk(K):
    if K <= 512:
        return _round_up(K, 8)
    for cand in (512, 384, 256, 128):
        if K % cand == 0:
            return cand
    return 256


def _pick_tn(N):
    if N < 128:
        return N
    if N % 256 == 0:
        return 256
    if N % 128 == 0:
        return 128
    return 128


def matmul_bn_act(a, b, scale, bias, residual=None, relu=True,
                  out_dtype=jnp.bfloat16):
    """Fused (a @ b) * scale + bias [+ residual] [ReLU], bf16 MXU / f32 acc."""
    a = a.astype(jnp.bfloat16)
    b = b.astype(jnp.bfloat16)
    M, K = a.shape
    Kb, N = b.shape
    assert K == Kb

    tk = _pick_tk(K)
    Kp = _round_up(K, tk)
    tn = _pick_tn(N)
    Np = _round_up(N, tn)
    tm = min(256, _round_up(M, 8))
    Mp = _round_up(M, tm)

    a_p = _pad2d(a, Mp, Kp)
    b_p = _pad2d(b, Kp, Np)
    scale_p = _pad2d(scale.reshape(1, N).astype(jnp.float32), 1, Np)
    bias_p = _pad2d(bias.reshape(1, N).astype(jnp.float32), 1, Np)

    in_specs = [
        pl.BlockSpec((tm, tk), lambda i, j, k: (i, k)),
        pl.BlockSpec((tk, tn), lambda i, j, k: (k, j)),
        pl.BlockSpec((1, tn), lambda i, j, k: (0, j)),
        pl.BlockSpec((1, tn), lambda i, j, k: (0, j)),
    ]
    inputs = [a_p, b_p, scale_p, bias_p]
    if residual is not None:
        res_p = _pad2d(residual.astype(jnp.bfloat16), Mp, Np)
        in_specs.append(pl.BlockSpec((tm, tn), lambda i, j, k: (i, j)))
        inputs.append(res_p)

    kernel = _make_matmul_kernel(relu, residual is not None)

    out = pl.pallas_call(
        kernel,
        out_shape=jax.ShapeDtypeStruct((Mp, Np), out_dtype),
        grid_spec=pltpu.PrefetchScalarGridSpec(
            num_scalar_prefetch=0,
            grid=(Mp // tm, Np // tn, Kp // tk),
            in_specs=in_specs,
            out_specs=pl.BlockSpec((tm, tn), lambda i, j, k: (i, j)),
            scratch_shapes=[pltpu.VMEM((tm, tn), jnp.float32)],
        ),
        compiler_params=pltpu.CompilerParams(
            dimension_semantics=("parallel", "parallel", "arbitrary")),
    )(*inputs)
    if Mp != M or Np != N:
        out = out[:M, :N]
    return out


# ---------------------------------------------------------------------------
# Pallas kernel 2: stride-1 3x3 conv + BN + ReLU without HBM im2col.
# The padded input is flattened per-sample to rows (Hp*Wp, Cin); the 9 taps
# are 9 shifted 2-D matmuls accumulated inside the kernel (static offsets
# dy*Wp + dx).  Grid = (Cout tiles, batch).
# ---------------------------------------------------------------------------
def _make_conv3x3_kernel(offsets, R):
    def kernel(x_ref, w_ref, scale_ref, bias_ref, o_ref):
        tn = o_ref.shape[-1]
        acc = jnp.zeros((R, tn), jnp.float32)
        for t in range(9):
            a = x_ref[0, pl.ds(offsets[t], R), :]
            acc = acc + jnp.dot(a, w_ref[t],
                                preferred_element_type=jnp.float32)
        y = acc * scale_ref[...] + bias_ref[...]
        y = jnp.maximum(y, 0.0)
        o_ref[0] = y.astype(o_ref.dtype)

    return kernel


def conv3x3_s1_bn_relu(x, w9, scale, bias, out_dtype=jnp.bfloat16):
    """3x3 conv (stride 1, pad 1) + BN + ReLU.  x: (N,H,W,Cin), w9: (9,Cin,Cout)."""
    x = x.astype(jnp.bfloat16)
    w9 = w9.astype(jnp.bfloat16)
    N, H, W, Cin = x.shape
    Cout = w9.shape[-1]
    Wp, Hp = W + 2, H + 3           # one extra bottom row so all tap slices stay in-bounds
    R = H * Wp                      # "super-rows": valid outputs are cols [0, W)
    xp = jnp.pad(x, ((0, 0), (1, 2), (1, 1), (0, 0))).reshape(N, Hp * Wp, Cin)

    tn = _pick_tn(Cout)
    Cp = _round_up(Cout, tn)
    if Cp != Cout:
        w9 = jnp.pad(w9, ((0, 0), (0, 0), (0, Cp - Cout)))
    scale_p = _pad2d(scale.reshape(1, Cout).astype(jnp.float32), 1, Cp)
    bias_p = _pad2d(bias.reshape(1, Cout).astype(jnp.float32), 1, Cp)

    offsets = tuple(dy * Wp + dx for dy in range(3) for dx in range(3))
    kernel = _make_conv3x3_kernel(offsets, R)

    out = pl.pallas_call(
        kernel,
        out_shape=jax.ShapeDtypeStruct((N, R, Cp), out_dtype),
        grid_spec=pltpu.PrefetchScalarGridSpec(
            num_scalar_prefetch=0,
            grid=(Cp // tn, N),
            in_specs=[
                pl.BlockSpec((1, Hp * Wp, Cin), lambda j, n: (n, 0, 0)),
                pl.BlockSpec((9, Cin, tn), lambda j, n: (0, 0, j)),
                pl.BlockSpec((1, tn), lambda j, n: (0, j)),
                pl.BlockSpec((1, tn), lambda j, n: (0, j)),
            ],
            out_specs=pl.BlockSpec((1, R, tn), lambda j, n: (n, 0, j)),
        ),
        compiler_params=pltpu.CompilerParams(
            dimension_semantics=("parallel", "parallel")),
    )(xp, w9, scale_p, bias_p)

    out = out.reshape(N, H, Wp, Cp)[:, :, :W, :Cout]
    return out


# ---------------------------------------------------------------------------
# im2col fallback (only for the two stride-2 3x3 convs in the whole network)
# ---------------------------------------------------------------------------
def _im2col3x3(x, stride):
    N, H, W, C = x.shape
    xp = jnp.pad(x, ((0, 0), (1, 1), (1, 1), (0, 0)))
    Ho = (H + 2 - 3) // stride + 1
    Wo = (W + 2 - 3) // stride + 1
    cols = []
    for dy in range(3):
        for dx in range(3):
            cols.append(xp[:, dy:dy + Ho * stride:stride,
                           dx:dx + Wo * stride:stride, :])
    cols = jnp.concatenate(cols, axis=-1)            # (N, Ho, Wo, 9*C)
    return cols.reshape(N * Ho * Wo, 9 * C), (Ho, Wo)


# ---------------------------------------------------------------------------
# Parameter init (deterministic), weights/BN pre-folded and pre-cast to bf16.
# ---------------------------------------------------------------------------
def _conv1x1_mat(w):        # (Cout, Cin, 1, 1) -> (Cin, Cout)
    return w[:, :, 0, 0].T


def _conv3x3_mat(w):        # (Cout, Cin, 3, 3) -> (9, Cin, Cout), tap=(dy*3+dx)
    cout, cin = w.shape[0], w.shape[1]
    return jnp.transpose(w, (2, 3, 1, 0)).reshape(9, cin, cout)


def _bn_params(key, c, eps=1e-5):
    k1, k2, k3, k4 = jax.random.split(key, 4)
    gamma = 1.0 + 0.1 * jax.random.normal(k1, (c,), jnp.float32)
    beta = 0.1 * jax.random.normal(k2, (c,), jnp.float32)
    mean = 0.1 * jax.random.normal(k3, (c,), jnp.float32)
    var = 1.0 + 0.1 * jax.random.uniform(k4, (c,), jnp.float32)
    scale = gamma / jnp.sqrt(var + eps)
    bias = beta - mean * scale
    return scale, bias


def _conv_w(key, cout, cin, k):
    fan_in = cin * k * k
    std = (2.0 / fan_in) ** 0.5
    return std * jax.random.normal(key, (cout, cin, k, k), jnp.float32)


# ResNet-50 bottleneck layer configs; last_conv_stride=1 -> layer4 stride 1.
_LAYER_CFG = [  # (planes, blocks, stride)
    (64, 3, 1),
    (128, 4, 2),
    (256, 6, 2),
    (512, 3, 1),
]
_EXPANSION = 4


def init_params(seed=0):
    key = jax.random.PRNGKey(seed)
    params = []
    in_ch = 64
    for planes, blocks, stride in _LAYER_CFG:
        layer = []
        for bi in range(blocks):
            s = stride if bi == 0 else 1
            key, k0, k1, k2, k3, k4, k5 = jax.random.split(key, 7)
            block = {
                "w1": _conv1x1_mat(_conv_w(k0, planes, in_ch, 1)).astype(jnp.bfloat16),
                "bn1": _bn_params(k1, planes),
                "w2": _conv3x3_mat(_conv_w(k2, planes, planes, 3)).astype(jnp.bfloat16),
                "bn2": _bn_params(k3, planes),
                "w3": _conv1x1_mat(_conv_w(k4, planes * _EXPANSION, planes, 1)).astype(jnp.bfloat16),
                "bn3": _bn_params(k5, planes * _EXPANSION),
                "stride": s,
            }
            if bi == 0 and (s != 1 or in_ch != planes * _EXPANSION):
                key, kd1, kd2 = jax.random.split(key, 3)
                block["wd"] = _conv1x1_mat(
                    _conv_w(kd1, planes * _EXPANSION, in_ch, 1)).astype(jnp.bfloat16)
                block["bnd"] = _bn_params(kd2, planes * _EXPANSION)
            layer.append(block)
            in_ch = planes * _EXPANSION
        params.append(layer)
    return params


# ---------------------------------------------------------------------------
# Bottleneck / layer forward
# ---------------------------------------------------------------------------
def bottleneck_forward(x, block):
    N, H, W, Cin = x.shape
    stride = block["stride"]
    planes = block["w2"].shape[1]

    # conv1 1x1 + BN + ReLU
    s1, b1 = block["bn1"]
    out = matmul_bn_act(x.reshape(N * H * W, Cin), block["w1"], s1, b1, relu=True)
    out = out.reshape(N, H, W, planes)

    # conv2 3x3 (stride) + BN + ReLU
    s2, b2 = block["bn2"]
    if stride == 1:
        out = conv3x3_s1_bn_relu(out, block["w2"], s2, b2)
        Ho, Wo = H, W
    else:
        # TODO(synk): strided 3x3 could also be folded into the kernel; im2col
        # fallback is only hit by the two stride-2 convs (layer2/3 first block).
        cols, (Ho, Wo) = _im2col3x3(out, stride)
        out = matmul_bn_act(cols, block["w2"].reshape(9 * planes, planes),
                            s2, b2, relu=True)
        out = out.reshape(N, Ho, Wo, planes)

    # identity path (downsample conv1x1+BN for first block of each layer)
    if "wd" in block:
        xs = x[:, ::stride, ::stride, :] if stride > 1 else x
        sd, bd = block["bnd"]
        identity = matmul_bn_act(xs.reshape(N * Ho * Wo, Cin), block["wd"],
                                 sd, bd, relu=False)
    else:
        identity = x.reshape(N * H * W, Cin)

    # conv3 1x1 + BN + residual add + ReLU (all fused in the kernel epilogue)
    s3, b3 = block["bn3"]
    out = matmul_bn_act(out.reshape(N * Ho * Wo, planes), block["w3"], s3, b3,
                        residual=identity, relu=True)
    return out.reshape(N, Ho, Wo, planes * _EXPANSION)


def base_resnet_forward(x_nchw, params, share_net=1):
    """Mirrors base_resnet.forward for share_net in 1..4: applies
    layer<share_net> .. layer4 of ResNet-50 (bottleneck blocks, eval-mode BN).
    For share_net > 4 the input is returned unchanged."""
    # TODO(synk): share_net=0 (stem conv7x7 + maxpool + avgpool) not implemented.
    if share_net > 4:
        return x_nchw
    x = jnp.transpose(x_nchw, (0, 2, 3, 1)).astype(jnp.bfloat16)   # NCHW -> NHWC, bf16
    for li in range(share_net - 1, 4):
        for block in params[li]:
            x = bottleneck_forward(x, block)
    x = x.astype(jnp.float32)
    return jnp.transpose(x, (0, 3, 1, 2))                          # NHWC -> NCHW


if __name__ == "__main__":
    # share_net=1: forward input is the post-stem/maxpool feature map
    # (N, 64, H/4, W/4).  Small spatial size for a quick run.
    key = jax.random.PRNGKey(0)
    x = jax.random.normal(key, (2, 64, 16, 16), jnp.float32)

    params = init_params(seed=0)
    y = base_resnet_forward(x, params, share_net=1)
    y = jax.block_until_ready(y)

    assert y.shape == (2, 2048, 4, 4), y.shape     # layer4 stride=1
    assert bool(jnp.all(jnp.isfinite(y)))
    print("KERNEL_OK")
</pallas_src>

<mosaic_0001>
module attributes {stable_mosaic.version = 11 : i64} {
  func.func @kernel(%arg0: i32, %arg1: i32, %arg2: i32, %arg3: memref<256x64xbf16, #tpu.memory_space<vmem>>, %arg4: memref<64x64xbf16, #tpu.memory_space<vmem>>, %arg5: memref<1x64xf32, #tpu.memory_space<vmem>>, %arg6: memref<1x64xf32, #tpu.memory_space<vmem>>, %arg7: memref<256x64xbf16, #tpu.memory_space<vmem>>, %arg8: memref<256x64xf32, #tpu.memory_space<vmem>>) attributes {dimension_semantics = [#tpu.dimension_semantics<parallel>, #tpu.dimension_semantics<parallel>, #tpu.dimension_semantics<arbitrary>], iteration_bounds = array<i64: 2, 1, 1>, scalar_prefetch = 0 : i64, scratch_operands = 1 : i64, tpu.core_type = #tpu.core_type<tc>, window_params = [{transform_indices = @transform_0, window_bounds = array<i64: 256, 64>}, {transform_indices = @transform_1, window_bounds = array<i64: 64, 64>}, {transform_indices = @transform_2, window_bounds = array<i64: 1, 64>}, {transform_indices = @transform_3, window_bounds = array<i64: 1, 64>}, {transform_indices = @transform_4, window_bounds = array<i64: 256, 64>}]} {
    %c0_i32 = arith.constant 0 : i32
    %0 = arith.cmpi eq, %arg2, %c0_i32 : i32
    %1 = arith.extui %0 : i1 to i32
    %c0_i32_0 = arith.constant 0 : i32
    %2 = arith.cmpi ne, %1, %c0_i32_0 : i32
    scf.if %2 {
      %cst_10 = arith.constant 0.000000e+00 : f32
      %12 = vector.broadcast %cst_10 : f32 to vector<256x64xf32>
      %c0_11 = arith.constant 0 : index
      %c0_12 = arith.constant 0 : index
      %13 = vector.load %arg8[%c0_11, %c0_12] : memref<256x64xf32, #tpu.memory_space<vmem>>, vector<256x64xf32>
      tpu.vector_store %arg8[%c0_11, %c0_12], %12 {strides = array<i32>} : memref<256x64xf32, #tpu.memory_space<vmem>>, vector<256x64xf32>,
    } else {
    }
    %c0 = arith.constant 0 : index
    %c0_1 = arith.constant 0 : index
    %3 = vector.load %arg8[%c0, %c0_1] : memref<256x64xf32, #tpu.memory_space<vmem>>, vector<256x64xf32>
    %c0_2 = arith.constant 0 : index
    %c0_3 = arith.constant 0 : index
    %4 = vector.load %arg3[%c0_2, %c0_3] : memref<256x64xbf16, #tpu.memory_space<vmem>>, vector<256x64xbf16>
    %c0_4 = arith.constant 0 : index
    %c0_5 = arith.constant 0 : index
    %5 = vector.load %arg4[%c0_4, %c0_5] : memref<64x64xbf16, #tpu.memory_space<vmem>>, vector<64x64xbf16>
    %cst = arith.constant dense<0.000000e+00> : vector<256x64xf32>
    %6 = tpu.matmul %4, %5, %cst {dimension_numbers = #tpu.dot_dimension_numbers<[1], [0], [0], [1], [0, 0, 1, 1], [], []>} : vector<256x64xbf16>, vector<64x64xbf16>, vector<256x64xf32> -> vector<256x64xf32>
    %7 = arith.addf %3, %6 : vector<256x64xf32>
    %c0_6 = arith.constant 0 : index
    %c0_7 = arith.constant 0 : index
    %8 = vector.load %arg8[%c0_6, %c0_7] : memref<256x64xf32, #tpu.memory_space<vmem>>, vector<256x64xf32>
    tpu.vector_store %arg8[%c0_6, %c0_7], %7 {strides = array<i32>} : memref<256x64xf32, #tpu.memory_space<vmem>>, vector<256x64xf32>,
    %c0_i32_8 = arith.constant 0 : i32
    %9 = arith.cmpi eq, %arg2, %c0_i32_8 : i32
    %10 = arith.extui %9 : i1 to i32
    %c0_i32_9 = arith.constant 0 : i32
    %11 = arith.cmpi ne, %10, %c0_i32_9 : i32
    scf.if %11 {
      %c0_10 = arith.constant 0 : index
      %c0_11 = arith.constant 0 : index
      %12 = vector.load %arg8[%c0_10, %c0_11] : memref<256x64xf32, #tpu.memory_space<vmem>>, vector<256x64xf32>
      %c0_12 = arith.constant 0 : index
      %c0_13 = arith.constant 0 : index
      %13 = vector.load %arg5[%c0_12, %c0_13] : memref<1x64xf32, #tpu.memory_space<vmem>>, vector<1x64xf32>
      %14 = vector.broadcast %13 : vector<1x64xf32> to vector<256x64xf32>
      %15 = arith.mulf %12, %14 : vector<256x64xf32>
      %c0_14 = arith.constant 0 : index
      %c0_15 = arith.constant 0 : index
      %16 = vector.load %arg6[%c0_14, %c0_15] : memref<1x64xf32, #tpu.memory_space<vmem>>, vector<1x64xf32>
      %17 = vector.broadcast %16 : vector<1x64xf32> to vector<256x64xf32>
      %18 = arith.addf %15, %17 : vector<256x64xf32>
      %cst_16 = arith.constant 0.000000e+00 : f32
      %19 = vector.broadcast %cst_16 : f32 to vector<256x64xf32>
      %20 = arith.maximumf %18, %19 : vector<256x64xf32>
      %21 = arith.truncf %20 : vector<256x64xf32> to vector<256x64xbf16>
      %c0_17 = arith.constant 0 : index
      %c0_18 = arith.constant 0 : index
      %22 = vector.load %arg7[%c0_17, %c0_18] : memref<256x64xbf16, #tpu.memory_space<vmem>>, vector<256x64xbf16>
      tpu.vector_store %arg7[%c0_17, %c0_18], %21 {strides = array<i32>} : memref<256x64xbf16, #tpu.memory_space<vmem>>, vector<256x64xbf16>,
    } else {
    }
    return
  }
  func.func @transform_0(%arg0: i32, %arg1: i32, %arg2: i32) -> (i32, i32) {
    %c0_i32 = arith.constant 0 : i32
    return %arg0, %arg2 : i32, i32
  }
  func.func @transform_1(%arg0: i32, %arg1: i32, %arg2: i32) -> (i32, i32) {
    %c0_i32 = arith.constant 0 : i32
    return %arg2, %arg1 : i32, i32
  }
  func.func @transform_2(%arg0: i32, %arg1: i32, %arg2: i32) -> (i32, i32) {
    %c0_i32 = arith.constant 0 : i32
    %c0_i32_0 = arith.constant 0 : i32
    return %c0_i32, %arg1 : i32, i32
  }
  func.func @transform_3(%arg0: i32, %arg1: i32, %arg2: i32) -> (i32, i32) {
    %c0_i32 = arith.constant 0 : i32
    %c0_i32_0 = arith.constant 0 : i32
    return %c0_i32, %arg1 : i32, i32
  }
  func.func @transform_4(%arg0: i32, %arg1: i32, %arg2: i32) -> (i32, i32) {
    %c0_i32 = arith.constant 0 : i32
    return %arg0, %arg1 : i32, i32
  }
}

</mosaic_0001>

<llo_original>
// kernel: tpu_custom_call.1
$region0: #{tpu_custom_call.1}
  #allocation0 [shape = 'u32[]', space=smem, size = 0x4, offset = 0x4, fixed_abs, tag = 'smem constant byte address 0x4 - core index']
  #allocation1 [shape = 'u32[144,128]{1,0:T(1,128)}', space=vmem, size = 0x12000, scoped, tag = 'internal scratch']
  #allocation2 [shape = 'f32[256,64]{1,0:T(8,128)}', space=vmem, size = 0x20000, scoped, tag = 'scratch operand']
  %s0 = inlined_call_operand.vmem [shape: bf16[512,64], index: 0, kind: input, shape index: {}]
  %s1 = inlined_call_operand.vmem [shape: bf16[64,64], index: 1, kind: input, shape index: {}]
  %s2 = inlined_call_operand.vmem [shape: f32[1,64], index: 2, kind: input, shape index: {}]
  %s3 = inlined_call_operand.vmem [shape: f32[1,64], index: 3, kind: input, shape index: {}]
  %s4 = inlined_call_operand.vmem [shape: bf16[512,64], index: 4, kind: output, shape index: {}]
  %s5 = sld [smem:[#allocation0]]
  $region57: #{tpu_custom_call.1} parent=0
    _
  %s7 = ssub.s32 1, %s5
  %s8 = scalar_select 0, %s7, %s5
  loop: start=0, step=1, limit=4
  $region2: #{tpu_custom_call.1} parent=0 // loop_pre_header
    _
  $region3: #{tpu_custom_call.1} parent=0 // loop_header
    %s10 = sphi 0, %s14
    %p11 = scmp.ge.s32.totalorder %s10, 4
    %s17 = sphi 0, %s36
    %s18 = sphi 0, %s32
    %s19 = sphi 0, %s28
    %s20 = sphi 0, %s17
    %s21 = sphi 0, %s18
    %s22 = sphi 0, %s19
    %s23 = sphi 0, %s20
    %s24 = sphi 0, %s21
    %s25 = sphi 0, %s22
    %s41 = sphi 0, %s43
    %s44 = sphi 0, %s41
    %s45 = sphi 0, %s44
    %s61 = sphi 0, %s45
    %s69 = sphi 0, %s71
    %s72 = sphi 0, %s69
    %s73 = sphi 0, %s72
    %s89 = sphi 0, %s73
    %s95 = sphi 0, %s97
    %s98 = sphi 0, %s95
    %s99 = sphi 0, %s98
    %s115 = sphi 0, %s99
    %s121 = sphi 0, %s123
    %s124 = sphi 0, %s121
    %s125 = sphi 0, %s124
    %s141 = sphi 0, %s125
    %s149 = sphi 0, %s151
    %s152 = sphi 0, %s149
    %s153 = sphi 0, %s152
    %s169 = sphi 0, %s153
  $region4: #{tpu_custom_call.1} parent=0 // loop_header_branch
    %13 = sbr.rel (%p11) target = $region8
  $region5: #{tpu_custom_call.1} parent=0 // loop_body
    %s15 = ssub.s32 %s10, 1
    %s16 = ssub.s32 %s10, 2
    %s26 = sadd.s32 1, %s19
    %p27 = scmp.ge.s32.totalorder %s26, 1
    %s28 = scalar_select %p27, 0, %s26
    %s29 = sadd.s32 1, %s18
    %s30 = scalar_select %p27, %s29, %s18
    %p31 = scmp.ge.s32.totalorder %s30, 1
    %s32 = scalar_select %p31, 0, %s30
    %s33 = sadd.s32 1, %s17
    %s34 = scalar_select %p31, %s33, %s17
    %p35 = scmp.ge.s32.totalorder %s34, 2
    %s36 = scalar_select %p35, 0, %s34
    %s37 = ssub.s32 %s17, %s36
    %s38 = ssub.s32 %s19, %s28
    %s39 = sor.u32 %s37, %s38
    %p40 = scmp.eq.s32.totalorder %s39, 0
    %s42 = sadd.s32 %s41, 1
    %s43 = scalar_select %p40, %s41, %s42
    %p46 = pneg %p40
    %p47 = scmp.eq.s32.totalorder %s10, 1
    %p48 = por %p46, %p47
    %p49 = scmp.ne.s32.totalorder %s41, %s44
    %p50 = scmp.eq.s32.totalorder %s10, 0
    %p51 = por %p49, %p50
    %p52 = scmp.ne.s32.totalorder %s41, %s44
    %p53 = scmp.eq.s32.totalorder %s15, 1
    %p54 = por %p52, %p53
    %p55 = scmp.ne.s32.totalorder %s44, %s45
    %p56 = scmp.eq.s32.totalorder %s15, 0
    %p57 = por %p55, %p56
    %p58 = scmp.ne.s32.totalorder %s44, %s45
    %p59 = scmp.eq.s32.totalorder %s16, 1
    %p60 = por %p58, %p59
    %p62 = scmp.ne.s32.totalorder %s45, %s61
    %p63 = scmp.eq.s32.totalorder %s16, 0
    %p64 = por %p62, %p63
    %s65 = ssub.s32 %s19, %s28
    %s66 = ssub.s32 %s18, %s32
    %s67 = sor.u32 %s65, %s66
    %p68 = scmp.eq.s32.totalorder %s67, 0
    %s70 = sadd.s32 %s69, 1
    %s71 = scalar_select %p68, %s69, %s70
    %p74 = pneg %p68
    %p75 = scmp.eq.s32.totalorder %s10, 1
    %p76 = por %p74, %p75
    %p77 = scmp.ne.s32.totalorder %s69, %s72
    %p78 = scmp.eq.s32.totalorder %s10, 0
    %p79 = por %p77, %p78
    %p80 = scmp.ne.s32.totalorder %s69, %s72
    %p81 = scmp.eq.s32.totalorder %s15, 1
    %p82 = por %p80, %p81
    %p83 = scmp.ne.s32.totalorder %s72, %s73
    %p84 = scmp.eq.s32.totalorder %s15, 0
    %p85 = por %p83, %p84
    %p86 = scmp.ne.s32.totalorder %s72, %s73
    %p87 = scmp.eq.s32.totalorder %s16, 1
    %p88 = por %p86, %p87
    %p90 = scmp.ne.s32.totalorder %s73, %s89
    %p91 = scmp.eq.s32.totalorder %s16, 0
    %p92 = por %p90, %p91
    %s93 = ssub.s32 %s18, %s32
    %p94 = scmp.eq.s32.totalorder %s93, 0
    %s96 = sadd.s32 %s95, 1
    %s97 = scalar_select %p94, %s95, %s96
    %p100 = pneg %p94
    %p101 = scmp.eq.s32.totalorder %s10, 1
    %p102 = por %p100, %p101
    %p103 = scmp.ne.s32.totalorder %s95, %s98
    %p104 = scmp.eq.s32.totalorder %s10, 0
    %p105 = por %p103, %p104
    %p106 = scmp.ne.s32.totalorder %s95, %s98
    %p107 = scmp.eq.s32.totalorder %s15, 1
    %p108 = por %p106, %p107
    %p109 = scmp.ne.s32.totalorder %s98, %s99
    %p110 = scmp.eq.s32.totalorder %s15, 0
    %p111 = por %p109, %p110
    %p112 = scmp.ne.s32.totalorder %s98, %s99
    %p113 = scmp.eq.s32.totalorder %s16, 1
    %p114 = por %p112, %p113
    %p116 = scmp.ne.s32.totalorder %s99, %s115
    %p117 = scmp.eq.s32.totalorder %s16, 0
    %p118 = por %p116, %p117
    %s119 = ssub.s32 %s18, %s32
    %p120 = scmp.eq.s32.totalorder %s119, 0
    %s122 = sadd.s32 %s121, 1
    %s123 = scalar_select %p120, %s121, %s122
    %p126 = pneg %p120
    %p127 = scmp.eq.s32.totalorder %s10, 1
    %p128 = por %p126, %p127
    %p129 = scmp.ne.s32.totalorder %s121, %s124
    %p130 = scmp.eq.s32.totalorder %s10, 0
    %p131 = por %p129, %p130
    %p132 = scmp.ne.s32.totalorder %s121, %s124
    %p133 = scmp.eq.s32.totalorder %s15, 1
    %p134 = por %p132, %p133
    %p135 = scmp.ne.s32.totalorder %s124, %s125
    %p136 = scmp.eq.s32.totalorder %s15, 0
    %p137 = por %p135, %p136
    %p138 = scmp.ne.s32.totalorder %s124, %s125
    %p139 = scmp.eq.s32.totalorder %s16, 1
    %p140 = por %p138, %p139
    %p142 = scmp.ne.s32.totalorder %s125, %s141
    %p143 = scmp.eq.s32.totalorder %s16, 0
    %p144 = por %p142, %p143
    %s145 = ssub.s32 %s17, %s36
    %s146 = ssub.s32 %s18, %s32
    %s147 = sor.u32 %s145, %s146
    %p148 = scmp.eq.s32.totalorder %s147, 0
    %s150 = sadd.s32 %s149, 1
    %s151 = scalar_select %p148, %s149, %s150
    %p154 = pneg %p148
    %p155 = scmp.eq.s32.totalorder %s10, 1
    %p156 = por %p154, %p155
    %p157 = scmp.ne.s32.totalorder %s149, %s152
    %p158 = scmp.eq.s32.totalorder %s10, 0
    %p159 = por %p157, %p158
    %p160 = scmp.ne.s32.totalorder %s149, %s152
    %p161 = scmp.eq.s32.totalorder %s15, 1
    %p162 = por %p160, %p161
    %p163 = scmp.ne.s32.totalorder %s152, %s153
    %p164 = scmp.eq.s32.totalorder %s15, 0
    %p165 = por %p163, %p164
    %p166 = scmp.ne.s32.totalorder %s152, %s153
    %p167 = scmp.eq.s32.totalorder %s16, 1
    %p168 = por %p166, %p167
    %p170 = scmp.ne.s32.totalorder %s153, %s169
    %p171 = scmp.eq.s32.totalorder %s16, 0
    %p172 = por %p170, %p171
    %p173 = scmp.le.s32.totalorder 1, %s10
    %p174 = scmp.lt.s32.totalorder %s10, 3
    %p175 = pnand %p173, %p174
    %p176 = pneg %p175
    // Predicated region
    $region9: #{tpu_custom_call.1} parent=5 // pred_check
      _
    $region10: #{tpu_custom_call.1} parent=5 // pred_check_branch
      %178 = sbr.rel (%p175) target = $region12
    $region11: #{tpu_custom_call.1} parent=5 // pred_region
      %s179 = ssub.s32 %s10, 1
      // Predicated region
      $region13: #{tpu_custom_call.1} parent=11 // pred_check
        %p180 = pneg %p85
      $region14: #{tpu_custom_call.1} parent=11 // pred_check_branch
        %182 = sbr.rel (%p180) target = $region16
      $region15: #{tpu_custom_call.1} parent=11 // pred_region
        %s183 = smul.u32 8, %s22
        %p184 = scmp.lt.s32.totalorder %s183, 7
        %s185 = scalar_select %p184, %s183, 7
        %p186 = scmp.lt.s32.totalorder %s21, 0
        %s187 = scalar_select %p186, %s21, 0
        %s188 = sadd.s32 %s187, %s185
        %s189 = smul.addr %s188, 4
        %s190 = scalar_lea.vmem %s1, %s189
        %s191 = smul.u32 8, %s22
      $region16: #{tpu_custom_call.1} parent=11 // pred_fallthru
        _
      // Predicated region
      $region17: #{tpu_custom_call.1} parent=11 // pred_check
        %p192 = pneg %p111
      $region18: #{tpu_custom_call.1} parent=11 // pred_check_branch
        %194 = sbr.rel (%p192) target = $region20
      $region19: #{tpu_custom_call.1} parent=11 // pred_region
        %p195 = scmp.lt.s32.totalorder %s21, 0
        %s196 = scalar_select %p195, %s21, 0
        %s197 = scalar_lea.vmem %s2, %s196
      $region20: #{tpu_custom_call.1} parent=11 // pred_fallthru
        _
      // Predicated region
      $region21: #{tpu_custom_call.1} parent=11 // pred_check
        %p198 = pneg %p137
      $region22: #{tpu_custom_call.1} parent=11 // pred_check_branch
        %200 = sbr.rel (%p198) target = $region24
      $region23: #{tpu_custom_call.1} parent=11 // pred_region
        %p201 = scmp.lt.s32.totalorder %s21, 0
        %s202 = scalar_select %p201, %s21, 0
        %s203 = scalar_lea.vmem %s3, %s202
      $region24: #{tpu_custom_call.1} parent=11 // pred_fallthru
        _
    $region12: #{tpu_custom_call.1} parent=5 // pred_fallthru
      _
    %p204 = scmp.lt.s32.totalorder %s10, 2
    // Predicated region
    $region25: #{tpu_custom_call.1} parent=5 // pred_check
      %p205 = pneg %p204
    $region26: #{tpu_custom_call.1} parent=5 // pred_check_branch
      %207 = sbr.rel (%p205) target = $region28
    $region27: #{tpu_custom_call.1} parent=5 // pred_region
      // Predicated region
      $region29: #{tpu_custom_call.1} parent=27 // pred_check
        %p208 = pneg %p51
      $region30: #{tpu_custom_call.1} parent=27 // pred_check_branch
        %210 = sbr.rel (%p208) target = $region32
      $region31: #{tpu_custom_call.1} parent=27 // pred_region
        %s211 = smul.u32 32, %s17
        %p212 = scmp.lt.s32.totalorder %s211, 63
        %s213 = scalar_select %p212, %s211, 63
        %p214 = scmp.lt.s32.totalorder %s19, 0
        %s215 = scalar_select %p214, %s19, 0
        %s216 = sadd.s32 %s215, %s213
        %s217 = smul.addr %s216, 4
        %s218 = scalar_lea.vmem %s0, %s217
        %s219 = smul.u32 32, %s17
      $region32: #{tpu_custom_call.1} parent=27 // pred_fallthru
        _
    $region28: #{tpu_custom_call.1} parent=5 // pred_fallthru
      _
    %p220 = scmp.le.s32.totalorder 1, %s10
    %p221 = scmp.lt.s32.totalorder %s10, 3
    %p222 = pnand %p220, %p221
    %p223 = pneg %p222
    // Predicated region
    $region33: #{tpu_custom_call.1} parent=5 // pred_check
      _
    $region34: #{tpu_custom_call.1} parent=5 // pred_check_branch
      %225 = sbr.rel (%p222) target = $region36
    $region35: #{tpu_custom_call.1} parent=5 // pred_region
      %s226 = ssub.s32 %s10, 1
      %s227 = smul.u32 32, %s20
      %p228 = scmp.lt.s32.totalorder %s227, 63
      %s229 = scalar_select %p228, %s227, 63
      %p230 = scmp.lt.s32.totalorder %s22, 0
      %s231 = scalar_select %p230, %s22, 0
      %s232 = sadd.s32 %s231, %s229
      %s233 = smul.addr %s232, 4
      %s234 = scalar_lea.vmem %s0, %s233
      %p235 = pneg %p57
      %p236 = pneg %p54
      %s237 = smul.u32 8, %s22
      %p238 = scmp.lt.s32.totalorder %s237, 7
      %s239 = scalar_select %p238, %s237, 7
      %p240 = scmp.lt.s32.totalorder %s21, 0
      %s241 = scalar_select %p240, %s21, 0
      %s242 = sadd.s32 %s241, %s239
      %s243 = smul.addr %s242, 4
      %s244 = scalar_lea.vmem %s1, %s243
      %p245 = pneg %p85
      %p246 = pneg %p82
      %p247 = scmp.lt.s32.totalorder %s21, 0
      %s248 = scalar_select %p247, %s21, 0
      %s249 = scalar_lea.vmem %s2, %s248
      %p250 = pneg %p111
      %p251 = pneg %p108
      %p252 = scmp.lt.s32.totalorder %s21, 0
      %s253 = scalar_select %p252, %s21, 0
      %s254 = scalar_lea.vmem %s3, %s253
      %p255 = pneg %p137
      %p256 = pneg %p134
      %p257 = pneg %p165
      %p258 = pneg %p162
      %s259 = smul.u32 32, %s20
      %p260 = scmp.lt.s32.totalorder %s259, 63
      %s261 = scalar_select %p260, %s259, 63
      %p262 = scmp.lt.s32.totalorder %s21, 0
      %s263 = scalar_select %p262, %s21, 0
      %s264 = sadd.s32 %s263, %s261
      %s265 = smul.addr %s264, 4
      %s266 = scalar_lea.vmem %s4, %s265
      %s267 = smul.u32 32, %s20
      %p268 = scmp.lt.s32.totalorder %s267, 63
      %s269 = scalar_select %p268, %s267, 63
      %p270 = scmp.lt.s32.totalorder %s22, 0
      %s271 = scalar_select %p270, %s22, 0
      %s272 = sadd.s32 %s271, %s269
      %s273 = smul.addr %s272, 4
      %s274 = scalar_lea.vmem %s0, %s273
      %s275 = smul.u32 32, %s20
      %s276 = smul.u32 8, %s22
      %p277 = scmp.lt.s32.totalorder %s276, 7
      %s278 = scalar_select %p277, %s276, 7
      %p279 = scmp.lt.s32.totalorder %s21, 0
      %s280 = scalar_select %p279, %s21, 0
      %s281 = sadd.s32 %s280, %s278
      %s282 = smul.addr %s281, 4
      %s283 = scalar_lea.vmem %s1, %s282
      %s284 = smul.u32 8, %s22
      %p285 = scmp.lt.s32.totalorder %s21, 0
      %s286 = scalar_select %p285, %s21, 0
      %s287 = scalar_lea.vmem %s2, %s286
      %p288 = scmp.lt.s32.totalorder %s21, 0
      %s289 = scalar_select %p288, %s21, 0
      %s290 = scalar_lea.vmem %s3, %s289
      %s291 = smul.u32 32, %s20
      %p292 = scmp.lt.s32.totalorder %s291, 63
      %s293 = scalar_select %p292, %s291, 63
      %p294 = scmp.lt.s32.totalorder %s21, 0
      %s295 = scalar_select %p294, %s21, 0
      %s296 = sadd.s32 %s295, %s293
      %s297 = smul.addr %s296, 4
      %s298 = scalar_lea.vmem %s4, %s297
      %s299 = smul.u32 32, %s20
      %p301 = scmp.eq.s32.totalorder %s22, 0
      // Predicated region
      $region37: #{tpu_custom_call.1} parent=35 // pred_check
        %p302 = pneg %p301
      $region38: #{tpu_custom_call.1} parent=35 // pred_check_branch
        %304 = sbr.rel (%p302) target = $region40
      $region39: #{tpu_custom_call.1} parent=35 // pred_region
        %vm305 = vcmask 523264
        %306 = vst.msk [vmem:[#allocation2] sm:$0xff] %vm305, 0.0
        %307 = vst.msk [vmem:[#allocation2 + $0x8] sm:$0xff] %vm305, 0.0
        %308 = vst.msk [vmem:[#allocation2 + $0x10] sm:$0xff] %vm305, 0.0
        %309 = vst.msk [vmem:[#allocation2 + $0x18] sm:$0xff] %vm305, 0.0
        %310 = vst.msk [vmem:[#allocation2 + $0x20] sm:$0xff] %vm305, 0.0
        %311 = vst.msk [vmem:[#allocation2 + $0x28] sm:$0xff] %vm305, 0.0
        %312 = vst.msk [vmem:[#allocation2 + $0x30] sm:$0xff] %vm305, 0.0
        %313 = vst.msk [vmem:[#allocation2 + $0x38] sm:$0xff] %vm305, 0.0
        %314 = vst.msk [vmem:[#allocation2 + $0x40] sm:$0xff] %vm305, 0.0
        %315 = vst.msk [vmem:[#allocation2 + $0x48] sm:$0xff] %vm305, 0.0
        %316 = vst.msk [vmem:[#allocation2 + $0x50] sm:$0xff] %vm305, 0.0
        %317 = vst.msk [vmem:[#allocation2 + $0x58] sm:$0xff] %vm305, 0.0
        %318 = vst.msk [vmem:[#allocation2 + $0x60] sm:$0xff] %vm305, 0.0
        %319 = vst.msk [vmem:[#allocation2 + $0x68] sm:$0xff] %vm305, 0.0
        %320 = vst.msk [vmem:[#allocation2 + $0x70] sm:$0xff] %vm305, 0.0
        %321 = vst.msk [vmem:[#allocation2 + $0x78] sm:$0xff] %vm305, 0.0
        %322 = vst.msk [vmem:[#allocation2 + $0x80] sm:$0xff] %vm305, 0.0
        %323 = vst.msk [vmem:[#allocation2 + $0x88] sm:$0xff] %vm305, 0.0
        %324 = vst.msk [vmem:[#allocation2 + $0x90] sm:$0xff] %vm305, 0.0
        %325 = vst.msk [vmem:[#allocation2 + $0x98] sm:$0xff] %vm305, 0.0
        %326 = vst.msk [vmem:[#allocation2 + $0xa0] sm:$0xff] %vm305, 0.0
        %327 = vst.msk [vmem:[#allocation2 + $0xa8] sm:$0xff] %vm305, 0.0
        %328 = vst.msk [vmem:[#allocation2 + $0xb0] sm:$0xff] %vm305, 0.0
        %329 = vst.msk [vmem:[#allocation2 + $0xb8] sm:$0xff] %vm305, 0.0
        %330 = vst.msk [vmem:[#allocation2 + $0xc0] sm:$0xff] %vm305, 0.0
        %331 = vst.msk [vmem:[#allocation2 + $0xc8] sm:$0xff] %vm305, 0.0
        %332 = vst.msk [vmem:[#allocation2 + $0xd0] sm:$0xff] %vm305, 0.0
        %333 = vst.msk [vmem:[#allocation2 + $0xd8] sm:$0xff] %vm305, 0.0
        %334 = vst.msk [vmem:[#allocation2 + $0xe0] sm:$0xff] %vm305, 0.0
        %335 = vst.msk [vmem:[#allocation2 + $0xe8] sm:$0xff] %vm305, 0.0
        %336 = vst.msk [vmem:[#allocation2 + $0xf0] sm:$0xff] %vm305, 0.0
        %337 = vst.msk [vmem:[#allocation2 + $0xf8] sm:$0xff] %vm305, 0.0
      $region40: #{tpu_custom_call.1} parent=35 // pred_fallthru
        _
      %v338 = vld [vmem:[#allocation2] sm:$0xff]
      %v339 = vld [vmem:[#allocation2 + $0x8] sm:$0xff]
      %v340 = vld [vmem:[#allocation2 + $0x10] sm:$0xff]
      %v341 = vld [vmem:[#allocation2 + $0x18] sm:$0xff]
      %v342 = vld [vmem:[#allocation2 + $0x20] sm:$0xff]
      %v343 = vld [vmem:[#allocation2 + $0x28] sm:$0xff]
      %v344 = vld [vmem:[#allocation2 + $0x30] sm:$0xff]
      %v345 = vld [vmem:[#allocation2 + $0x38] sm:$0xff]
      %v346 = vld [vmem:[#allocation2 + $0x40] sm:$0xff]
      %v347 = vld [vmem:[#allocation2 + $0x48] sm:$0xff]
      %v348 = vld [vmem:[#allocation2 + $0x50] sm:$0xff]
      %v349 = vld [vmem:[#allocation2 + $0x58] sm:$0xff]
      %v350 = vld [vmem:[#allocation2 + $0x60] sm:$0xff]
      %v351 = vld [vmem:[#allocation2 + $0x68] sm:$0xff]
      %v352 = vld [vmem:[#allocation2 + $0x70] sm:$0xff]
      %v353 = vld [vmem:[#allocation2 + $0x78] sm:$0xff]
      %v354 = vld [vmem:[#allocation2 + $0x80] sm:$0xff]
      %v355 = vld [vmem:[#allocation2 + $0x88] sm:$0xff]
      %v356 = vld [vmem:[#allocation2 + $0x90] sm:$0xff]
      %v357 = vld [vmem:[#allocation2 + $0x98] sm:$0xff]
      %v358 = vld [vmem:[#allocation2 + $0xa0] sm:$0xff]
      %v359 = vld [vmem:[#allocation2 + $0xa8] sm:$0xff]
      %v360 = vld [vmem:[#allocation2 + $0xb0] sm:$0xff]
      %v361 = vld [vmem:[#allocation2 + $0xb8] sm:$0xff]
      %v362 = vld [vmem:[#allocation2 + $0xc0] sm:$0xff]
      %v363 = vld [vmem:[#allocation2 + $0xc8] sm:$0xff]
      %v364 = vld [vmem:[#allocation2 + $0xd0] sm:$0xff]
      %v365 = vld [vmem:[#allocation2 + $0xd8] sm:$0xff]
      %v366 = vld [vmem:[#allocation2 + $0xe0] sm:$0xff]
      %v367 = vld [vmem:[#allocation2 + $0xe8] sm:$0xff]
      %v368 = vld [vmem:[#allocation2 + $0xf0] sm:$0xff]
      %v369 = vld [vmem:[#allocation2 + $0xf8] sm:$0xff]
      %v370 = vld [vmem:[%s274] sm:$0xf]
      %v371 = vld [vmem:[%s274 + $0x4] sm:$0xf]
      %v372 = vld [vmem:[%s274 + $0x8] sm:$0xf]
      %v373 = vld [vmem:[%s274 + $0xc] sm:$0xf]
      %v374 = vld [vmem:[%s274 + $0x10] sm:$0xf]
      %v375 = vld [vmem:[%s274 + $0x14] sm:$0xf]
      %v376 = vld [vmem:[%s274 + $0x18] sm:$0xf]
      %v377 = vld [vmem:[%s274 + $0x1c] sm:$0xf]
      %v378 = vld [vmem:[%s274 + $0x20] sm:$0xf]
      %v379 = vld [vmem:[%s274 + $0x24] sm:$0xf]
      %v380 = vld [vmem:[%s274 + $0x28] sm:$0xf]
      %v381 = vld [vmem:[%s274 + $0x2c] sm:$0xf]
      %v382 = vld [vmem:[%s274 + $0x30] sm:$0xf]
      %v383 = vld [vmem:[%s274 + $0x34] sm:$0xf]
      %v384 = vld [vmem:[%s274 + $0x38] sm:$0xf]
      %v385 = vld [vmem:[%s274 + $0x3c] sm:$0xf]
      %v386 = vld [vmem:[%s274 + $0x40] sm:$0xf]
      %v387 = vld [vmem:[%s274 + $0x44] sm:$0xf]
      %v388 = vld [vmem:[%s274 + $0x48] sm:$0xf]
      %v389 = vld [vmem:[%s274 + $0x4c] sm:$0xf]
      %v390 = vld [vmem:[%s274 + $0x50] sm:$0xf]
      %v391 = vld [vmem:[%s274 + $0x54] sm:$0xf]
      %v392 = vld [vmem:[%s274 + $0x58] sm:$0xf]
      %v393 = vld [vmem:[%s274 + $0x5c] sm:$0xf]
      %v394 = vld [vmem:[%s274 + $0x60] sm:$0xf]
      %v395 = vld [vmem:[%s274 + $0x64] sm:$0xf]
      %v396 = vld [vmem:[%s274 + $0x68] sm:$0xf]
      %v397 = vld [vmem:[%s274 + $0x6c] sm:$0xf]
      %v398 = vld [vmem:[%s274 + $0x70] sm:$0xf]
      %v399 = vld [vmem:[%s274 + $0x74] sm:$0xf]
      %v400 = vld [vmem:[%s274 + $0x78] sm:$0xf]
      %v401 = vld [vmem:[%s274 + $0x7c] sm:$0xf]
      %v402 = vld [vmem:[%s283] sm:$0xf]
      %v403 = vld [vmem:[%s283 + $0x4] sm:$0xf]
      %v404 = vld [vmem:[%s283 + $0x8] sm:$0xf]
      %v405 = vld [vmem:[%s283 + $0xc] sm:$0xf]
      %v406 = vld [vmem:[%s283 + $0x10] sm:$0xf]
      %v407 = vld [vmem:[%s283 + $0x14] sm:$0xf]
      %v408 = vld [vmem:[%s283 + $0x18] sm:$0xf]
      %v409 = vld [vmem:[%s283 + $0x1c] sm:$0xf]
      %v442 = vunpack.c.l.b16 %v370
      %v443 = vunpack.c.l.b16 %v371
      %v444 = vunpack.c.l.b16 %v372
      %v445 = vunpack.c.l.b16 %v373
      %v446 = vunpack.c.l.b16 %v374
      %v447 = vunpack.c.l.b16 %v375
      %v448 = vunpack.c.l.b16 %v376
      %v449 = vunpack.c.l.b16 %v377
      %v450 = vunpack.c.l.b16 %v378
      %v451 = vunpack.c.l.b16 %v379
      %v452 = vunpack.c.l.b16 %v380
      %v453 = vunpack.c.l.b16 %v381
      %v454 = vunpack.c.l.b16 %v382
      %v455 = vunpack.c.l.b16 %v383
      %v456 = vunpack.c.l.b16 %v384
      %v457 = vunpack.c.l.b16 %v385
      %v458 = vunpack.c.l.b16 %v386
      %v459 = vunpack.c.l.b16 %v387
      %v460 = vunpack.c.l.b16 %v388
      %v461 = vunpack.c.l.b16 %v389
      %v462 = vunpack.c.l.b16 %v390
      %v463 = vunpack.c.l.b16 %v391
      %v464 = vunpack.c.l.b16 %v392
      %v465 = vunpack.c.l.b16 %v393
      %v466 = vunpack.c.l.b16 %v394
      %v467 = vunpack.c.l.b16 %v395
      %v468 = vunpack.c.l.b16 %v396
      %v469 = vunpack.c.l.b16 %v397
      %v470 = vunpack.c.l.b16 %v398
      %v471 = vunpack.c.l.b16 %v399
      %v472 = vunpack.c.l.b16 %v400
      %v473 = vunpack.c.l.b16 %v401
      %v474 = vpack.c.b16 %v443, %v442
      %v475 = vpack.c.b16 %v445, %v444
      %v476 = vpack.c.b16 %v447, %v446
      %v477 = vpack.c.b16 %v449, %v448
      %v478 = vpack.c.b16 %v451, %v450
      %v479 = vpack.c.b16 %v453, %v452
      %v480 = vpack.c.b16 %v455, %v454
      %v481 = vpack.c.b16 %v457, %v456
      %v482 = vpack.c.b16 %v459, %v458
      %v483 = vpack.c.b16 %v461, %v460
      %v484 = vpack.c.b16 %v463, %v462
      %v485 = vpack.c.b16 %v465, %v464
      %v486 = vpack.c.b16 %v467, %v466
      %v487 = vpack.c.b16 %v469, %v468
      %v488 = vpack.c.b16 %v471, %v470
      %v489 = vpack.c.b16 %v473, %v472
      %v498 = vunpack.c.l.b16 %v402
      %v499 = vunpack.c.l.b16 %v403
      %v500 = vunpack.c.l.b16 %v404
      %v501 = vunpack.c.l.b16 %v405
      %v502 = vunpack.c.l.b16 %v406
      %v503 = vunpack.c.l.b16 %v407
      %v504 = vunpack.c.l.b16 %v408
      %v505 = vunpack.c.l.b16 %v409
      %v506 = vpack.c.b16 %v499, %v498
      %v507 = vpack.c.b16 %v501, %v500
      %v508 = vpack.c.b16 %v503, %v502
      %v509 = vpack.c.b16 %v505, %v504
      %vm514 = vcmask 523264
      %v516 = vsel %vm514, %v474, 0
      %v519 = vsel %vm514, %v475, 0
      %v522 = vsel %vm514, %v476, 0
      %v525 = vsel %vm514, %v477, 0
      %v528 = vsel %vm514, %v478, 0
      %v531 = vsel %vm514, %v479, 0
      %v534 = vsel %vm514, %v480, 0
      %v537 = vsel %vm514, %v481, 0
      %v540 = vsel %vm514, %v482, 0
      %v543 = vsel %vm514, %v483, 0
      %v546 = vsel %vm514, %v484, 0
      %v549 = vsel %vm514, %v485, 0
      %v552 = vsel %vm514, %v486, 0
      %v555 = vsel %vm514, %v487, 0
      %v558 = vsel %vm514, %v488, 0
      %v561 = vsel %vm514, %v489, 0
      %563 = vmatprep.subr.bf16.mxu0 0
      %564 = vmatpush1.bf16.msra.mxu0 0
      %565 = vmatprep.subr.bf16.mxu0 0
      %566 = vmatpush1.bf16.msra.mxu0 0
      %567 = vmatprep.subr.bf16.mxu0 0
      %568 = vmatpush1.bf16.msra.mxu0 0
      %569 = vmatprep.subr.bf16.mxu0 0
      %570 = vmatpush1.bf16.msra.mxu0 0
      %571 = vmatprep.subr.bf16.mxu0 0
      %572 = vmatpush1.bf16.msra.mxu0 %v509
      %573 = vmatprep.subr.bf16.mxu0 0
      %574 = vmatpush1.bf16.msra.mxu0 %v508
      %575 = vmatprep.subr.bf16.mxu0 0
      %576 = vmatpush1.bf16.msra.mxu0 %v507
      %577 = vmatprep.subr.bf16.mxu0 0
      %578 = vmatpush1.bf16.msra.mxu0 %v506
      %579 = vmatprep.subr.bf16.mxu0 0
      %580 = vmatpush2.bf16.msra.mxu0 0
      %581 = vmatprep.subr.bf16.mxu0 0
      %582 = vmatpush2.bf16.msra.mxu0 0
      %583 = vmatprep.subr.bf16.mxu0 0
      %584 = vmatpush2.bf16.msra.mxu0 0
      %585 = vmatprep.subr.bf16.mxu0 0
      %586 = vmatpush2.bf16.msra.mxu0 0
      %587 = vmatprep.subr.bf16.mxu0 0
      %588 = vmatpush2.bf16.msra.mxu0 0
      %589 = vmatprep.subr.bf16.mxu0 0
      %590 = vmatpush2.bf16.msra.mxu0 0
      %591 = vmatprep.subr.bf16.mxu0 0
      %592 = vmatpush2.bf16.msra.mxu0 0
      %593 = vmatprep.subr.bf16.mxu0 0
      %594 = vmatpush2.bf16.msra.mxu0 0
      %595 = vmatprep.mubr.bf16.mxu0 0
      %596 = vmatmul.mubr.bf16.gmra.mxu0 %v516
      %v597 = vpop.f32.mrf.mxu0
      %v598 = vadd.f32 0.0, %v597
      %v599 = vpop.f32.mrf.mxu0
      %v600 = vpop.f32.mrf.mxu0
      %v601 = vadd.f32 0.0, %v600
      %v602 = vpop.f32.mrf.mxu0
      %603 = vmatprep.mubr.bf16.mxu0 0
      %604 = vmatmul.mubr.bf16.gmra.mxu0 %v519
      %v605 = vpop.f32.mrf.mxu0
      %v606 = vadd.f32 0.0, %v605
      %v607 = vpop.f32.mrf.mxu0
      %v608 = vpop.f32.mrf.mxu0
      %v609 = vadd.f32 0.0, %v608
      %v610 = vpop.f32.mrf.mxu0
      %611 = vmatprep.mubr.bf16.mxu0 0
      %612 = vmatmul.mubr.bf16.gmra.mxu0 %v522
      %v613 = vpop.f32.mrf.mxu0
      %v614 = vadd.f32 0.0, %v613
      %v615 = vpop.f32.mrf.mxu0
      %v616 = vpop.f32.mrf.mxu0
      %v617 = vadd.f32 0.0, %v616
      %v618 = vpop.f32.mrf.mxu0
      %619 = vmatprep.mubr.bf16.mxu0 0
      %620 = vmatmul.mubr.bf16.gmra.mxu0 %v525
      %v621 = vpop.f32.mrf.mxu0
      %v622 = vadd.f32 0.0, %v621
      %v623 = vpop.f32.mrf.mxu0
      %v624 = vpop.f32.mrf.mxu0
      %v625 = vadd.f32 0.0, %v624
      %v626 = vpop.f32.mrf.mxu0
      %627 = vmatprep.mubr.bf16.mxu0 0
      %628 = vmatmul.mubr.bf16.gmra.mxu0 %v528
      %v629 = vpop.f32.mrf.mxu0
      %v630 = vadd.f32 0.0, %v629
      %v631 = vpop.f32.mrf.mxu0
      %v632 = vpop.f32.mrf.mxu0
      %v633 = vadd.f32 0.0, %v632
      %v634 = vpop.f32.mrf.mxu0
      %635 = vmatprep.mubr.bf16.mxu0 0
      %636 = vmatmul.mubr.bf16.gmra.mxu0 %v531
      %v637 = vpop.f32.mrf.mxu0
      %v638 = vadd.f32 0.0, %v637
      %v639 = vpop.f32.mrf.mxu0
      %v640 = vpop.f32.mrf.mxu0
      %v641 = vadd.f32 0.0, %v640
      %v642 = vpop.f32.mrf.mxu0
      %643 = vmatprep.mubr.bf16.mxu0 0
      %644 = vmatmul.mubr.bf16.gmra.mxu0 %v534
      %v645 = vpop.f32.mrf.mxu0
      %v646 = vadd.f32 0.0, %v645
      %v647 = vpop.f32.mrf.mxu0
      %v648 = vpop.f32.mrf.mxu0
      %v649 = vadd.f32 0.0, %v648
      %v650 = vpop.f32.mrf.mxu0
      %651 = vmatprep.mubr.bf16.mxu0 0
      %652 = vmatmul.mubr.bf16.gmra.mxu0 %v537
      %v653 = vpop.f32.mrf.mxu0
      %v654 = vadd.f32 0.0, %v653
      %v655 = vpop.f32.mrf.mxu0
      %v656 = vpop.f32.mrf.mxu0
      %v657 = vadd.f32 0.0, %v656
      %v658 = vpop.f32.mrf.mxu0
      %659 = vmatprep.mubr.bf16.mxu0 0
      %660 = vmatmul.mubr.bf16.gmra.mxu0 %v540
      %v661 = vpop.f32.mrf.mxu0
      %v662 = vadd.f32 0.0, %v661
      %v663 = vpop.f32.mrf.mxu0
      %v664 = vpop.f32.mrf.mxu0
      %v665 = vadd.f32 0.0, %v664
      %v666 = vpop.f32.mrf.mxu0
      %667 = vmatprep.mubr.bf16.mxu0 0
      %668 = vmatmul.mubr.bf16.gmra.mxu0 %v543
      %v669 = vpop.f32.mrf.mxu0
      %v670 = vadd.f32 0.0, %v669
      %v671 = vpop.f32.mrf.mxu0
      %v672 = vpop.f32.mrf.mxu0
      %v673 = vadd.f32 0.0, %v672
      %v674 = vpop.f32.mrf.mxu0
      %675 = vmatprep.mubr.bf16.mxu0 0
      %676 = vmatmul.mubr.bf16.gmra.mxu0 %v546
      %v677 = vpop.f32.mrf.mxu0
      %v678 = vadd.f32 0.0, %v677
      %v679 = vpop.f32.mrf.mxu0
      %v680 = vpop.f32.mrf.mxu0
      %v681 = vadd.f32 0.0, %v680
      %v682 = vpop.f32.mrf.mxu0
      %683 = vmatprep.mubr.bf16.mxu0 0
      %684 = vmatmul.mubr.bf16.gmra.mxu0 %v549
      %v685 = vpop.f32.mrf.mxu0
      %v686 = vadd.f32 0.0, %v685
      %v687 = vpop.f32.mrf.mxu0
      %v688 = vpop.f32.mrf.mxu0
      %v689 = vadd.f32 0.0, %v688
      %v690 = vpop.f32.mrf.mxu0
      %691 = vmatprep.mubr.bf16.mxu0 0
      %692 = vmatmul.mubr.bf16.gmra.mxu0 %v552
      %v693 = vpop.f32.mrf.mxu0
      %v694 = vadd.f32 0.0, %v693
      %v695 = vpop.f32.mrf.mxu0
      %v696 = vpop.f32.mrf.mxu0
      %v697 = vadd.f32 0.0, %v696
      %v698 = vpop.f32.mrf.mxu0
      %699 = vmatprep.mubr.bf16.mxu0 0
      %700 = vmatmul.mubr.bf16.gmra.mxu0 %v555
      %v701 = vpop.f32.mrf.mxu0
      %v702 = vadd.f32 0.0, %v701
      %v703 = vpop.f32.mrf.mxu0
      %v704 = vpop.f32.mrf.mxu0
      %v705 = vadd.f32 0.0, %v704
      %v706 = vpop.f32.mrf.mxu0
      %707 = vmatprep.mubr.bf16.mxu0 0
      %708 = vmatmul.mubr.bf16.gmra.mxu0 %v558
      %v709 = vpop.f32.mrf.mxu0
      %v710 = vadd.f32 0.0, %v709
      %v711 = vpop.f32.mrf.mxu0
      %v712 = vpop.f32.mrf.mxu0
      %v713 = vadd.f32 0.0, %v712
      %v714 = vpop.f32.mrf.mxu0
      %715 = vmatprep.mubr.bf16.mxu0 0
      %716 = vmatmul.mubr.bf16.gmra.mxu0 %v561
      %v717 = vpop.f32.mrf.mxu0
      %v718 = vadd.f32 0.0, %v717
      %v719 = vpop.f32.mrf.mxu0
      %v720 = vpop.f32.mrf.mxu0
      %v721 = vadd.f32 0.0, %v720
      %v722 = vpop.f32.mrf.mxu0
      %723 = vdwg.mxu0
      %v724 = vadd.f32 %v338, %v598
      %v725 = vadd.f32 %v339, %v601
      %v726 = vadd.f32 %v340, %v606
      %v727 = vadd.f32 %v341, %v609
      %v728 = vadd.f32 %v342, %v614
      %v729 = vadd.f32 %v343, %v617
      %v730 = vadd.f32 %v344, %v622
      %v731 = vadd.f32 %v345, %v625
      %v732 = vadd.f32 %v346, %v630
      %v733 = vadd.f32 %v347, %v633
      %v734 = vadd.f32 %v348, %v638
      %v735 = vadd.f32 %v349, %v641
      %v736 = vadd.f32 %v350, %v646
      %v737 = vadd.f32 %v351, %v649
      %v738 = vadd.f32 %v352, %v654
      %v739 = vadd.f32 %v353, %v657
      %v740 = vadd.f32 %v354, %v662
      %v741 = vadd.f32 %v355, %v665
      %v742 = vadd.f32 %v356, %v670
      %v743 = vadd.f32 %v357, %v673
      %v744 = vadd.f32 %v358, %v678
      %v745 = vadd.f32 %v359, %v681
      %v746 = vadd.f32 %v360, %v686
      %v747 = vadd.f32 %v361, %v689
      %v748 = vadd.f32 %v362, %v694
      %v749 = vadd.f32 %v363, %v697
      %v750 = vadd.f32 %v364, %v702
      %v751 = vadd.f32 %v365, %v705
      %v752 = vadd.f32 %v366, %v710
      %v753 = vadd.f32 %v367, %v713
      %v754 = vadd.f32 %v368, %v718
      %v755 = vadd.f32 %v369, %v721
      %756 = vst.msk [vmem:[#allocation2] sm:$0xff] %vm514, %v724
      %757 = vst.msk [vmem:[#allocation2 + $0x8] sm:$0xff] %vm514, %v725
      %758 = vst.msk [vmem:[#allocation2 + $0x10] sm:$0xff] %vm514, %v726
      %759 = vst.msk [vmem:[#allocation2 + $0x18] sm:$0xff] %vm514, %v727
      %760 = vst.msk [vmem:[#allocation2 + $0x20] sm:$0xff] %vm514, %v728
      %761 = vst.msk [vmem:[#allocation2 + $0x28] sm:$0xff] %vm514, %v729
      %762 = vst.msk [vmem:[#allocation2 + $0x30] sm:$0xff] %vm514, %v730
      %763 = vst.msk [vmem:[#allocation2 + $0x38] sm:$0xff] %vm514, %v731
      %764 = vst.msk [vmem:[#allocation2 + $0x40] sm:$0xff] %vm514, %v732
      %765 = vst.msk [vmem:[#allocation2 + $0x48] sm:$0xff] %vm514, %v733
      %766 = vst.msk [vmem:[#allocation2 + $0x50] sm:$0xff] %vm514, %v734
      %767 = vst.msk [vmem:[#allocation2 + $0x58] sm:$0xff] %vm514, %v735
      %768 = vst.msk [vmem:[#allocation2 + $0x60] sm:$0xff] %vm514, %v736
      %769 = vst.msk [vmem:[#allocation2 + $0x68] sm:$0xff] %vm514, %v737
      %770 = vst.msk [vmem:[#allocation2 + $0x70] sm:$0xff] %vm514, %v738
      %771 = vst.msk [vmem:[#allocation2 + $0x78] sm:$0xff] %vm514, %v739
      %772 = vst.msk [vmem:[#allocation2 + $0x80] sm:$0xff] %vm514, %v740
      %773 = vst.msk [vmem:[#allocation2 + $0x88] sm:$0xff] %vm514, %v741
      %774 = vst.msk [vmem:[#allocation2 + $0x90] sm:$0xff] %vm514, %v742
      %775 = vst.msk [vmem:[#allocation2 + $0x98] sm:$0xff] %vm514, %v743
      %776 = vst.msk [vmem:[#allocation2 + $0xa0] sm:$0xff] %vm514, %v744
      %777 = vst.msk [vmem:[#allocation2 + $0xa8] sm:$0xff] %vm514, %v745
      %778 = vst.msk [vmem:[#allocation2 + $0xb0] sm:$0xff] %vm514, %v746
      %779 = vst.msk [vmem:[#allocation2 + $0xb8] sm:$0xff] %vm514, %v747
      %780 = vst.msk [vmem:[#allocation2 + $0xc0] sm:$0xff] %vm514, %v748
      %781 = vst.msk [vmem:[#allocation2 + $0xc8] sm:$0xff] %vm514, %v749
      %782 = vst.msk [vmem:[#allocation2 + $0xd0] sm:$0xff] %vm514, %v750
      %783 = vst.msk [vmem:[#allocation2 + $0xd8] sm:$0xff] %vm514, %v751
      %784 = vst.msk [vmem:[#allocation2 + $0xe0] sm:$0xff] %vm514, %v752
      %785 = vst.msk [vmem:[#allocation2 + $0xe8] sm:$0xff] %vm514, %v753
      %786 = vst.msk [vmem:[#allocation2 + $0xf0] sm:$0xff] %vm514, %v754
      %787 = vst.msk [vmem:[#allocation2 + $0xf8] sm:$0xff] %vm514, %v755
      // Predicated region
      $region41: #{tpu_custom_call.1} parent=35 // pred_check
        %p788 = pneg %p301
      $region42: #{tpu_custom_call.1} parent=35 // pred_check_branch
        %790 = sbr.rel (%p788) target = $region44
      $region43: #{tpu_custom_call.1} parent=35 // pred_region
        %v791 = vld [vmem:[#allocation2] sm:$0xff]
        %v792 = vld [vmem:[#allocation2 + $0x8] sm:$0xff]
        %v793 = vld [vmem:[#allocation2 + $0x10] sm:$0xff]
        %v794 = vld [vmem:[#allocation2 + $0x18] sm:$0xff]
        %v795 = vld [vmem:[#allocation2 + $0x20] sm:$0xff]
        %v796 = vld [vmem:[#allocation2 + $0x28] sm:$0xff]
        %v797 = vld [vmem:[#allocation2 + $0x30] sm:$0xff]
        %v798 = vld [vmem:[#allocation2 + $0x38] sm:$0xff]
        %v799 = vld [vmem:[#allocation2 + $0x40] sm:$0xff]
        %v800 = vld [vmem:[#allocation2 + $0x48] sm:$0xff]
        %v801 = vld [vmem:[#allocation2 + $0x50] sm:$0xff]
        %v802 = vld [vmem:[#allocation2 + $0x58] sm:$0xff]
        %v803 = vld [vmem:[#allocation2 + $0x60] sm:$0xff]
        %v804 = vld [vmem:[#allocation2 + $0x68] sm:$0xff]
        %v805 = vld [vmem:[#allocation2 + $0x70] sm:$0xff]
        %v806 = vld [vmem:[#allocation2 + $0x78] sm:$0xff]
        %v807 = vld [vmem:[#allocation2 + $0x80] sm:$0xff]
        %v808 = vld [vmem:[#allocation2 + $0x88] sm:$0xff]
        %v809 = vld [vmem:[#allocation2 + $0x90] sm:$0xff]
        %v810 = vld [vmem:[#allocation2 + $0x98] sm:$0xff]
        %v811 = vld [vmem:[#allocation2 + $0xa0] sm:$0xff]
        %v812 = vld [vmem:[#allocation2 + $0xa8] sm:$0xff]
        %v813 = vld [vmem:[#allocation2 + $0xb0] sm:$0xff]
        %v814 = vld [vmem:[#allocation2 + $0xb8] sm:$0xff]
        %v815 = vld [vmem:[#allocation2 + $0xc0] sm:$0xff]
        %v816 = vld [vmem:[#allocation2 + $0xc8] sm:$0xff]
        %v817 = vld [vmem:[#allocation2 + $0xd0] sm:$0xff]
        %v818 = vld [vmem:[#allocation2 + $0xd8] sm:$0xff]
        %v819 = vld [vmem:[#allocation2 + $0xe0] sm:$0xff]
        %v820 = vld [vmem:[#allocation2 + $0xe8] sm:$0xff]
        %v821 = vld [vmem:[#allocation2 + $0xf0] sm:$0xff]
        %v822 = vld [vmem:[#allocation2 + $0xf8] sm:$0xff]
        %v823 = vld [vmem:[%s287] sm:$0x1]
        %v825 = vlaneseq
        %v826 = vshrl.u32 %v825, 7
        %v827 = vsub.s32 0, %v826
        %v828 = vrot.slane %v823, %v827
        %v830 = vmul.f32 %v791, %v828
        %v831 = vmul.f32 %v792, %v828
        %v832 = vmul.f32 %v793, %v828
        %v833 = vmul.f32 %v794, %v828
        %v834 = vmul.f32 %v795, %v828
        %v835 = vmul.f32 %v796, %v828
        %v836 = vmul.f32 %v797, %v828
        %v837 = vmul.f32 %v798, %v828
        %v838 = vmul.f32 %v799, %v828
        %v839 = vmul.f32 %v800, %v828
        %v840 = vmul.f32 %v801, %v828
        %v841 = vmul.f32 %v802, %v828
        %v842 = vmul.f32 %v803, %v828
        %v843 = vmul.f32 %v804, %v828
        %v844 = vmul.f32 %v805, %v828
        %v845 = vmul.f32 %v806, %v828
        %v846 = vmul.f32 %v807, %v828
        %v847 = vmul.f32 %v808, %v828
        %v848 = vmul.f32 %v809, %v828
        %v849 = vmul.f32 %v810, %v828
        %v850 = vmul.f32 %v811, %v828
        %v851 = vmul.f32 %v812, %v828
        %v852 = vmul.f32 %v813, %v828
        %v853 = vmul.f32 %v814, %v828
        %v854 = vmul.f32 %v815, %v828
        %v855 = vmul.f32 %v816, %v828
        %v856 = vmul.f32 %v817, %v828
        %v857 = vmul.f32 %v818, %v828
        %v858 = vmul.f32 %v819, %v828
        %v859 = vmul.f32 %v820, %v828
        %v860 = vmul.f32 %v821, %v828
        %v861 = vmul.f32 %v822, %v828
        %v862 = vld [vmem:[%s290] sm:$0x1]
        %v864 = vlaneseq
        %v865 = vshrl.u32 %v864, 7
        %v866 = vsub.s32 0, %v865
        %v867 = vrot.slane %v862, %v866
        %v869 = vadd.f32 %v830, %v867
        %v870 = vadd.f32 %v831, %v867
        %v871 = vadd.f32 %v832, %v867
        %v872 = vadd.f32 %v833, %v867
        %v873 = vadd.f32 %v834, %v867
        %v874 = vadd.f32 %v835, %v867
        %v875 = vadd.f32 %v836, %v867
        %v876 = vadd.f32 %v837, %v867
        %v877 = vadd.f32 %v838, %v867
        %v878 = vadd.f32 %v839, %v867
        %v879 = vadd.f32 %v840, %v867
        %v880 = vadd.f32 %v841, %v867
        %v881 = vadd.f32 %v842, %v867
        %v882 = vadd.f32 %v843, %v867
        %v883 = vadd.f32 %v844, %v867
        %v884 = vadd.f32 %v845, %v867
        %v885 = vadd.f32 %v846, %v867
        %v886 = vadd.f32 %v847, %v867
        %v887 = vadd.f32 %v848, %v867
        %v888 = vadd.f32 %v849, %v867
        %v889 = vadd.f32 %v850, %v867
        %v890 = vadd.f32 %v851, %v867
        %v891 = vadd.f32 %v852, %v867
        %v892 = vadd.f32 %v853, %v867
        %v893 = vadd.f32 %v854, %v867
        %v894 = vadd.f32 %v855, %v867
        %v895 = vadd.f32 %v856, %v867
        %v896 = vadd.f32 %v857, %v867
        %v897 = vadd.f32 %v858, %v867
        %v898 = vadd.f32 %v859, %v867
        %v899 = vadd.f32 %v860, %v867
        %v900 = vadd.f32 %v861, %v867
        %v901 = vmax.f32 %v869, 0.0
        %v902 = vmax.f32 %v870, 0.0
        %v903 = vmax.f32 %v871, 0.0
        %v904 = vmax.f32 %v872, 0.0
        %v905 = vmax.f32 %v873, 0.0
        %v906 = vmax.f32 %v874, 0.0
        %v907 = vmax.f32 %v875, 0.0
        %v908 = vmax.f32 %v876, 0.0
        %v909 = vmax.f32 %v877, 0.0
        %v910 = vmax.f32 %v878, 0.0
        %v911 = vmax.f32 %v879, 0.0
        %v912 = vmax.f32 %v880, 0.0
        %v913 = vmax.f32 %v881, 0.0
        %v914 = vmax.f32 %v882, 0.0
        %v915 = vmax.f32 %v883, 0.0
        %v916 = vmax.f32 %v884, 0.0
        %v917 = vmax.f32 %v885, 0.0
        %v918 = vmax.f32 %v886, 0.0
        %v919 = vmax.f32 %v887, 0.0
        %v920 = vmax.f32 %v888, 0.0
        %v921 = vmax.f32 %v889, 0.0
        %v922 = vmax.f32 %v890, 0.0
        %v923 = vmax.f32 %v891, 0.0
        %v924 = vmax.f32 %v892, 0.0
        %v925 = vmax.f32 %v893, 0.0
        %v926 = vmax.f32 %v894, 0.0
        %v927 = vmax.f32 %v895, 0.0
        %v928 = vmax.f32 %v896, 0.0
        %v929 = vmax.f32 %v897, 0.0
        %v930 = vmax.f32 %v898, 0.0
        %v931 = vmax.f32 %v899, 0.0
        %v932 = vmax.f32 %v900, 0.0
        %v933 = vpack.c.bf16 %v902, %v901
        %v934 = vpack.c.bf16 %v904, %v903
        %v935 = vpack.c.bf16 %v906, %v905
        %v936 = vpack.c.bf16 %v908, %v907
        %v937 = vpack.c.bf16 %v910, %v909
        %v938 = vpack.c.bf16 %v912, %v911
        %v939 = vpack.c.bf16 %v914, %v913
        %v940 = vpack.c.bf16 %v916, %v915
        %v941 = vpack.c.bf16 %v918, %v917
        %v942 = vpack.c.bf16 %v920, %v919
        %v943 = vpack.c.bf16 %v922, %v921
        %v944 = vpack.c.bf16 %v924, %v923
        %v945 = vpack.c.bf16 %v926, %v925
        %v946 = vpack.c.bf16 %v928, %v927
        %v947 = vpack.c.bf16 %v930, %v929
        %v948 = vpack.c.bf16 %v932, %v931
        %v965 = vunpack.c.l.b16 %v933
        %v966 = vunpack.c.h.b16 %v933
        %v967 = vunpack.c.l.b16 %v934
        %v968 = vunpack.c.h.b16 %v934
        %v969 = vunpack.c.l.b16 %v935
        %v970 = vunpack.c.h.b16 %v935
        %v971 = vunpack.c.l.b16 %v936
        %v972 = vunpack.c.h.b16 %v936
        %v973 = vunpack.c.l.b16 %v937
        %v974 = vunpack.c.h.b16 %v937
        %v975 = vunpack.c.l.b16 %v938
        %v976 = vunpack.c.h.b16 %v938
        %v977 = vunpack.c.l.b16 %v939
        %v978 = vunpack.c.h.b16 %v939
        %v979 = vunpack.c.l.b16 %v940
        %v980 = vunpack.c.h.b16 %v940
        %v981 = vunpack.c.l.b16 %v941
        %v982 = vunpack.c.h.b16 %v941
        %v983 = vunpack.c.l.b16 %v942
        %v984 = vunpack.c.h.b16 %v942
        %v985 = vunpack.c.l.b16 %v943
        %v986 = vunpack.c.h.b16 %v943
        %v987 = vunpack.c.l.b16 %v944
        %v988 = vunpack.c.h.b16 %v944
        %v989 = vunpack.c.l.b16 %v945
        %v990 = vunpack.c.h.b16 %v945
        %v991 = vunpack.c.l.b16 %v946
        %v992 = vunpack.c.h.b16 %v946
        %v993 = vunpack.c.l.b16 %v947
        %v994 = vunpack.c.h.b16 %v947
        %v995 = vunpack.c.l.b16 %v948
        %v996 = vunpack.c.h.b16 %v948
        %v997 = vpack.c.b16 %v965, %v965
        %v998 = vpack.c.b16 %v966, %v966
        %v999 = vpack.c.b16 %v967, %v967
        %v1000 = vpack.c.b16 %v968, %v968
        %v1001 = vpack.c.b16 %v969, %v969
        %v1002 = vpack.c.b16 %v970, %v970
        %v1003 = vpack.c.b16 %v971, %v971
        %v1004 = vpack.c.b16 %v972, %v972
        %v1005 = vpack.c.b16 %v973, %v973
        %v1006 = vpack.c.b16 %v974, %v974
        %v1007 = vpack.c.b16 %v975, %v975
        %v1008 = vpack.c.b16 %v976, %v976
        %v1009 = vpack.c.b16 %v977, %v977
        %v1010 = vpack.c.b16 %v978, %v978
        %v1011 = vpack.c.b16 %v979, %v979
        %v1012 = vpack.c.b16 %v980, %v980
        %v1013 = vpack.c.b16 %v981, %v981
        %v1014 = vpack.c.b16 %v982, %v982
        %v1015 = vpack.c.b16 %v983, %v983
        %v1016 = vpack.c.b16 %v984, %v984
        %v1017 = vpack.c.b16 %v985, %v985
        %v1018 = vpack.c.b16 %v986, %v986
        %v1019 = vpack.c.b16 %v987, %v987
        %v1020 = vpack.c.b16 %v988, %v988
        %v1021 = vpack.c.b16 %v989, %v989
        %v1022 = vpack.c.b16 %v990, %v990
        %v1023 = vpack.c.b16 %v991, %v991
        %v1024 = vpack.c.b16 %v992, %v992
        %v1025 = vpack.c.b16 %v993, %v993
        %v1026 = vpack.c.b16 %v994, %v994
        %v1027 = vpack.c.b16 %v995, %v995
        %v1028 = vpack.c.b16 %v996, %v996
        %vm1061 = vcmask 519168
        %1062 = vst.msk [vmem:[%s298] sm:$0xf] %vm1061, %v997
        %1063 = vst.msk [vmem:[%s298 + $0x4] sm:$0xf] %vm1061, %v998
        %1064 = vst.msk [vmem:[%s298 + $0x8] sm:$0xf] %vm1061, %v999
        %1065 = vst.msk [vmem:[%s298 + $0xc] sm:$0xf] %vm1061, %v1000
        %1066 = vst.msk [vmem:[%s298 + $0x10] sm:$0xf] %vm1061, %v1001
        %1067 = vst.msk [vmem:[%s298 + $0x14] sm:$0xf] %vm1061, %v1002
        %1068 = vst.msk [vmem:[%s298 + $0x18] sm:$0xf] %vm1061, %v1003
        %1069 = vst.msk [vmem:[%s298 + $0x1c] sm:$0xf] %vm1061, %v1004
        %1070 = vst.msk [vmem:[%s298 + $0x20] sm:$0xf] %vm1061, %v1005
        %1071 = vst.msk [vmem:[%s298 + $0x24] sm:$0xf] %vm1061, %v1006
        %1072 = vst.msk [vmem:[%s298 + $0x28] sm:$0xf] %vm1061, %v1007
        %1073 = vst.msk [vmem:[%s298 + $0x2c] sm:$0xf] %vm1061, %v1008
        %1074 = vst.msk [vmem:[%s298 + $0x30] sm:$0xf] %vm1061, %v1009
        %1075 = vst.msk [vmem:[%s298 + $0x34] sm:$0xf] %vm1061, %v1010
        %1076 = vst.msk [vmem:[%s298 + $0x38] sm:$0xf] %vm1061, %v1011
        %1077 = vst.msk [vmem:[%s298 + $0x3c] sm:$0xf] %vm1061, %v1012
        %1078 = vst.msk [vmem:[%s298 + $0x40] sm:$0xf] %vm1061, %v1013
        %1079 = vst.msk [vmem:[%s298 + $0x44] sm:$0xf] %vm1061, %v1014
        %1080 = vst.msk [vmem:[%s298 + $0x48] sm:$0xf] %vm1061, %v1015
        %1081 = vst.msk [vmem:[%s298 + $0x4c] sm:$0xf] %vm1061, %v1016
        %1082 = vst.msk [vmem:[%s298 + $0x50] sm:$0xf] %vm1061, %v1017
        %1083 = vst.msk [vmem:[%s298 + $0x54] sm:$0xf] %vm1061, %v1018
        %1084 = vst.msk [vmem:[%s298 + $0x58] sm:$0xf] %vm1061, %v1019
        %1085 = vst.msk [vmem:[%s298 + $0x5c] sm:$0xf] %vm1061, %v1020
        %1086 = vst.msk [vmem:[%s298 + $0x60] sm:$0xf] %vm1061, %v1021
        %1087 = vst.msk [vmem:[%s298 + $0x64] sm:$0xf] %vm1061, %v1022
        %1088 = vst.msk [vmem:[%s298 + $0x68] sm:$0xf] %vm1061, %v1023
        %1089 = vst.msk [vmem:[%s298 + $0x6c] sm:$0xf] %vm1061, %v1024
        %1090 = vst.msk [vmem:[%s298 + $0x70] sm:$0xf] %vm1061, %v1025
        %1091 = vst.msk [vmem:[%s298 + $0x74] sm:$0xf] %vm1061, %v1026
        %1092 = vst.msk [vmem:[%s298 + $0x78] sm:$0xf] %vm1061, %v1027
        %1093 = vst.msk [vmem:[%s298 + $0x7c] sm:$0xf] %vm1061, %v1028
      $region44: #{tpu_custom_call.1} parent=35 // pred_fallthru
        _
      %s1094 = smul.u32 32, %s20
      %p1095 = scmp.lt.s32.totalorder %s1094, 63
      %s1096 = scalar_select %p1095, %s1094, 63
      %p1097 = scmp.lt.s32.totalorder %s21, 0
      %s1098 = scalar_select %p1097, %s21, 0
      %s1099 = sadd.s32 %s1098, %s1096
      %s1100 = smul.addr %s1099, 4
      %s1101 = scalar_lea.vmem %s4, %s1100
      // Predicated region
      $region45: #{tpu_custom_call.1} parent=35 // pred_check
        %p1102 = pneg %p162
      $region46: #{tpu_custom_call.1} parent=35 // pred_check_branch
        %1104 = sbr.rel (%p1102) target = $region48
      $region47: #{tpu_custom_call.1} parent=35 // pred_region
        %s1105 = smul.u32 32, %s20
      $region48: #{tpu_custom_call.1} parent=35 // pred_fallthru
        _
    $region36: #{tpu_custom_call.1} parent=5 // pred_fallthru
      _
    %p1106 = scmp.le.s32.totalorder 2, %s10
    // Predicated region
    $region49: #{tpu_custom_call.1} parent=5 // pred_check
      %p1107 = pneg %p1106
    $region50: #{tpu_custom_call.1} parent=5 // pred_check_branch
      %1109 = sbr.rel (%p1107) target = $region52
    $region51: #{tpu_custom_call.1} parent=5 // pred_region
      %s1110 = ssub.s32 %s10, 2
      // Predicated region
      $region53: #{tpu_custom_call.1} parent=51 // pred_check
        %p1111 = pneg %p168
      $region54: #{tpu_custom_call.1} parent=51 // pred_check_branch
        %1113 = sbr.rel (%p1111) target = $region56
      $region55: #{tpu_custom_call.1} parent=51 // pred_region
        %s1114 = smul.u32 32, %s23
        %p1115 = scmp.lt.s32.totalorder %s1114, 63
        %s1116 = scalar_select %p1115, %s1114, 63
        %p1117 = scmp.lt.s32.totalorder %s24, 0
        %s1118 = scalar_select %p1117, %s24, 0
        %s1119 = sadd.s32 %s1118, %s1116
        %s1120 = smul.addr %s1119, 4
        %s1121 = scalar_lea.vmem %s4, %s1120
      $region56: #{tpu_custom_call.1} parent=51 // pred_fallthru
        _
    $region52: #{tpu_custom_call.1} parent=5 // pred_fallthru
      _
  $region6: #{tpu_custom_call.1} parent=0 // loop_footer
    %s14 = sadd.s32 1, %s10
  $region7: #{tpu_custom_call.1} parent=0 // loop_footer_branch
    %9 = sbr.rel target = $region3
  $region8: #{tpu_custom_call.1} parent=0 // loop_exit
    _

</llo_original>
